<compile_context>
chip_gen: v6e
topology: v6e:2x2x1
jax: 0.10.0
libtpu: 0.0.40
codegen_flags: <defaults>
</compile_context>

<pallas_src>
import functools

import jax
import jax.numpy as jnp
from jax.experimental import pallas as pl
from jax.experimental.pallas import tpu as pltpu


def _lrpad_kernel(x_ref, o_ref, *, H, W, h, w):
    # x_ref block: (B, H, W);  o_ref block: (B, H + 2h, W + 2w)
    # Interior copy — the dominant store, written exactly once.
    o_ref[:, h:h + H, w:w + W] = x_ref[...].astype(o_ref.dtype)

    if w > 0:
        # Circular wrap along W: left strip <- last w cols, right strip <- first w cols.
        o_ref[:, h:h + H, :w] = x_ref[:, :, W - w:].astype(o_ref.dtype)
        o_ref[:, h:h + H, w + W:] = x_ref[:, :, :w].astype(o_ref.dtype)

    if h > 0:
        # Zero pad along H: only the 2h border rows are written with zeros.
        zeros = jnp.zeros((o_ref.shape[0], h, o_ref.shape[2]), o_ref.dtype)
        o_ref[:, :h, :] = zeros
        o_ref[:, h + H:, :] = zeros


def lrpad(x, padding, *, vmem_block_budget_bytes=12 * 1024 * 1024):
    """Pallas implementation of LRPad.forward for NCHW input."""
    if isinstance(padding, int):
        h = padding
        w = padding
    else:
        h, w = padding[0], padding[1]

    N, C, H, W = x.shape
    # Mirrors the original PyTorch module's assertion.
    assert H % 2 == 0 and W % 2 == 0
    # Circular padding wider than W would silently wrap incorrectly.
    assert w <= W, "circular pad width must not exceed W"
    if h == 0 and w == 0:
        return x

    out_H, out_W = H + 2 * h, W + 2 * w
    NC = N * C
    x2 = x.reshape(NC, H, W)

    # Size the per-step block: keep double-buffered (in + out) blocks within a
    # conservative budget that fits the scoped VMEM of v5e/v6e/v7x.
    itemsize = jnp.dtype(x.dtype).itemsize
    per_slice_bytes = 2 * (H * W + out_H * out_W) * itemsize  # double-buffered
    B = max(1, min(NC, vmem_block_budget_bytes // per_slice_bytes))
    while NC % B != 0:  # keep the grid evenly divisible
        B -= 1

    kernel = functools.partial(_lrpad_kernel, H=H, W=W, h=h, w=w)

    out = pl.pallas_call(
        kernel,
        out_shape=jax.ShapeDtypeStruct((NC, out_H, out_W), x.dtype),
        grid=(NC // B,),
        in_specs=[pl.BlockSpec((B, H, W), lambda i: (i, 0, 0))],
        out_specs=pl.BlockSpec((B, out_H, out_W), lambda i: (i, 0, 0)),
        compiler_params=pltpu.CompilerParams(
            dimension_semantics=("parallel",),
            vmem_limit_bytes=32 * 1024 * 1024,
        ),
    )(x2)
    return out.reshape(N, C, out_H, out_W)


def _lrpad_ref(x, padding):
    """Pure-JAX reference mirroring the PyTorch semantics."""
    if isinstance(padding, int):
        h = padding
        w = padding
    else:
        h, w = padding[0], padding[1]
    if h == 0 and w == 0:
        return x
    x = jnp.pad(x, ((0, 0), (0, 0), (0, 0), (w, w)), mode="wrap")
    x = jnp.pad(x, ((0, 0), (0, 0), (h, h), (0, 0)), mode="constant")
    return x


if __name__ == "__main__":
    key = jax.random.PRNGKey(0)
    x = jax.random.normal(key, (2, 4, 16, 16), dtype=jnp.float32)

    # Test 1: tuple padding (h=1 zero rows, w=2 circular columns), fp32.
    padding = (1, 2)
    out = jax.block_until_ready(lrpad(x, padding))
    ref = _lrpad_ref(x, padding)
    assert out.shape == ref.shape, (out.shape, ref.shape)
    assert jnp.allclose(out, ref), "Pallas LRPad mismatch vs reference (fp32)"

    # Test 2: int padding, bf16 (padding is exact data movement).
    x_bf16 = x.astype(jnp.bfloat16)
    out2 = jax.block_until_ready(lrpad(x_bf16, 1))
    ref2 = _lrpad_ref(x_bf16, 1)
    assert out2.shape == ref2.shape, (out2.shape, ref2.shape)
    assert jnp.array_equal(out2, ref2), "Pallas LRPad mismatch vs reference (bf16)"

    print("KERNEL_OK")
</pallas_src>

<mosaic_0001>
module attributes {stable_mosaic.version = 11 : i64} {
  func.func @_lrpad_kernel(%arg0: i32, %arg1: memref<8x16x16xf32, #tpu.memory_space<vmem>>, %arg2: memref<8x18x20xf32, #tpu.memory_space<vmem>>) attributes {dimension_semantics = [#tpu.dimension_semantics<parallel>], iteration_bounds = array<i64: 1>, scalar_prefetch = 0 : i64, scratch_operands = 0 : i64, tpu.core_type = #tpu.core_type<tc>, window_params = [{transform_indices = @transform_0, window_bounds = array<i64: 8, 16, 16>}, {transform_indices = @transform_1, window_bounds = array<i64: 8, 18, 20>}]} {
    %c0 = arith.constant 0 : index
    %c0_0 = arith.constant 0 : index
    %c0_1 = arith.constant 0 : index
    %0 = vector.load %arg1[%c0, %c0_0, %c0_1] : memref<8x16x16xf32, #tpu.memory_space<vmem>>, vector<8x16x16xf32>
    %c0_2 = arith.constant 0 : index
    %c1 = arith.constant 1 : index
    %c2 = arith.constant 2 : index
    %1 = vector.load %arg2[%c0_2, %c1, %c2] : memref<8x18x20xf32, #tpu.memory_space<vmem>>, vector<8x16x16xf32>
    tpu.vector_store %arg2[%c0_2, %c1, %c2], %0 {strides = array<i32>} : memref<8x18x20xf32, #tpu.memory_space<vmem>>, vector<8x16x16xf32>,
    %c0_3 = arith.constant 0 : index
    %c0_4 = arith.constant 0 : index
    %c14 = arith.constant 14 : index
    %2 = vector.load %arg1[%c0_3, %c0_4, %c14] : memref<8x16x16xf32, #tpu.memory_space<vmem>>, vector<8x16x2xf32>
    %c0_5 = arith.constant 0 : index
    %c1_6 = arith.constant 1 : index
    %c0_7 = arith.constant 0 : index
    %3 = vector.load %arg2[%c0_5, %c1_6, %c0_7] : memref<8x18x20xf32, #tpu.memory_space<vmem>>, vector<8x16x2xf32>
    tpu.vector_store %arg2[%c0_5, %c1_6, %c0_7], %2 {strides = array<i32>} : memref<8x18x20xf32, #tpu.memory_space<vmem>>, vector<8x16x2xf32>,
    %c0_8 = arith.constant 0 : index
    %c0_9 = arith.constant 0 : index
    %c0_10 = arith.constant 0 : index
    %4 = vector.load %arg1[%c0_8, %c0_9, %c0_10] : memref<8x16x16xf32, #tpu.memory_space<vmem>>, vector<8x16x2xf32>
    %c0_11 = arith.constant 0 : index
    %c1_12 = arith.constant 1 : index
    %c18 = arith.constant 18 : index
    %5 = vector.load %arg2[%c0_11, %c1_12, %c18] : memref<8x18x20xf32, #tpu.memory_space<vmem>>, vector<8x16x2xf32>
    tpu.vector_store %arg2[%c0_11, %c1_12, %c18], %4 {strides = array<i32>} : memref<8x18x20xf32, #tpu.memory_space<vmem>>, vector<8x16x2xf32>,
    %cst = arith.constant 0.000000e+00 : f32
    %6 = vector.broadcast %cst : f32 to vector<8x1x20xf32>
    %c0_13 = arith.constant 0 : index
    %c0_14 = arith.constant 0 : index
    %c0_15 = arith.constant 0 : index
    %7 = vector.load %arg2[%c0_13, %c0_14, %c0_15] : memref<8x18x20xf32, #tpu.memory_space<vmem>>, vector<8x1x20xf32>
    tpu.vector_store %arg2[%c0_13, %c0_14, %c0_15], %6 {strides = array<i32>} : memref<8x18x20xf32, #tpu.memory_space<vmem>>, vector<8x1x20xf32>,
    %c0_16 = arith.constant 0 : index
    %c17 = arith.constant 17 : index
    %c0_17 = arith.constant 0 : index
    %8 = vector.load %arg2[%c0_16, %c17, %c0_17] : memref<8x18x20xf32, #tpu.memory_space<vmem>>, vector<8x1x20xf32>
    tpu.vector_store %arg2[%c0_16, %c17, %c0_17], %6 {strides = array<i32>} : memref<8x18x20xf32, #tpu.memory_space<vmem>>, vector<8x1x20xf32>,
    return
  }
  func.func @transform_0(%arg0: i32) -> (i32, i32, i32) {
    %c0_i32 = arith.constant 0 : i32
    %c0_i32_0 = arith.constant 0 : i32
    %c0_i32_1 = arith.constant 0 : i32
    return %arg0, %c0_i32, %c0_i32_0 : i32, i32, i32
  }
  func.func @transform_1(%arg0: i32) -> (i32, i32, i32) {
    %c0_i32 = arith.constant 0 : i32
    %c0_i32_0 = arith.constant 0 : i32
    %c0_i32_1 = arith.constant 0 : i32
    return %arg0, %c0_i32, %c0_i32_0 : i32, i32, i32
  }
}

</mosaic_0001>

<llo_original>
// kernel: tpu_custom_call.1
$region0: #{tpu_custom_call.1}
  #allocation0 [shape = 'u32[]', space=smem, size = 0x4, offset = 0x4, fixed_abs, tag = 'smem constant byte address 0x4 - core index']
  #allocation1 [shape = 'u32[144,128]{1,0:T(1,128)}', space=vmem, size = 0x12000, scoped, tag = 'internal scratch']
  %s0 = inlined_call_operand.hbm [shape: f32[8,16,16], index: 0, kind: input, shape index: {}]
  %s1 = inlined_call_operand.vmem [shape: f32[8,18,20], index: 1, kind: output, shape index: {}]
  %s2 = sld [smem:[#allocation0]]
  $region18: #{tpu_custom_call.1} parent=0
    _
  %s4 = ssub.s32 1, %s2
  %s5 = scalar_select 0, %s4, %s2
  $region1: #{tpu_custom_call.1} parent=0
    #allocation2 [shape = 'u8[65536]{0}', space=vmem, size = 0x10000, scoped, tag = 'input window, operand 0, single buffered']
    #allocation3 [shape = 's32[1]{0}', space=sflag, size = 0x4, scoped, tag = 'scoped memory for tpu_custom_call.1']
    %6 = vsyncpa [#allocation3], 0
    // Predicated region
    $region2: #{tpu_custom_call.1} parent=1 // pred_check
      _
    $region3: #{tpu_custom_call.1} parent=1 // pred_check_branch
      %8 = sbr.rel (0) target = $region5
    $region4: #{tpu_custom_call.1} parent=1 // pred_region
      %s10 = ssub.s32 2048, 2048
      %11 = vsyncadd [#allocation3], %s10
      %s12 = sshll.u32 [#allocation2], 4
      %s13 = int_to_ptr.vmem [resolvable:$true] %s12
      %18 = dma.hbm_to_vmem [thread:$0]  %s0, 2048, %s13, [#allocation3], 128, 128, 8
    $region5: #{tpu_custom_call.1} parent=1 // pred_fallthru
      _
    // Predicated region
    $region6: #{tpu_custom_call.1} parent=1 // pred_check
      _
    $region7: #{tpu_custom_call.1} parent=1 // pred_check_branch
      %20 = sbr.rel (0) target = $region9
    $region8: #{tpu_custom_call.1} parent=1 // pred_region
      %21 = dma.done [#allocation3], 2048
    $region9: #{tpu_custom_call.1} parent=1 // pred_fallthru
      _
    %v22 = vld [vmem:[#allocation2] sm:$0xff]
    %v23 = vld [vmem:[#allocation2 + $0x8] sm:$0xff]
    %v24 = vld [vmem:[#allocation2 + $0x10] sm:$0xff]
    %v25 = vld [vmem:[#allocation2 + $0x18] sm:$0xff]
    %v26 = vld [vmem:[#allocation2 + $0x20] sm:$0xff]
    %v27 = vld [vmem:[#allocation2 + $0x28] sm:$0xff]
    %v28 = vld [vmem:[#allocation2 + $0x30] sm:$0xff]
    %v29 = vld [vmem:[#allocation2 + $0x38] sm:$0xff]
    %v30 = vld [vmem:[#allocation2 + $0x40] sm:$0xff]
    %v31 = vld [vmem:[#allocation2 + $0x48] sm:$0xff]
    %v32 = vld [vmem:[#allocation2 + $0x50] sm:$0xff]
    %v33 = vld [vmem:[#allocation2 + $0x58] sm:$0xff]
    %v34 = vld [vmem:[#allocation2 + $0x60] sm:$0xff]
    %v35 = vld [vmem:[#allocation2 + $0x68] sm:$0xff]
    %v36 = vld [vmem:[#allocation2 + $0x70] sm:$0xff]
    %v37 = vld [vmem:[#allocation2 + $0x78] sm:$0xff]
    %54 = vrot.lane.b32.xlu0 %v22, 2
    %v55 = vpop.permute.xlu0 %54
    %56 = vrot.lane.b32.xlu0 %v23, 2
    %v57 = vpop.permute.xlu0 %56
    %58 = vrot.lane.b32.xlu0 %v24, 2
    %v59 = vpop.permute.xlu0 %58
    %60 = vrot.lane.b32.xlu0 %v25, 2
    %v61 = vpop.permute.xlu0 %60
    %62 = vrot.lane.b32.xlu0 %v26, 2
    %v63 = vpop.permute.xlu0 %62
    %64 = vrot.lane.b32.xlu0 %v27, 2
    %v65 = vpop.permute.xlu0 %64
    %66 = vrot.lane.b32.xlu0 %v28, 2
    %v67 = vpop.permute.xlu0 %66
    %68 = vrot.lane.b32.xlu0 %v29, 2
    %v69 = vpop.permute.xlu0 %68
    %70 = vrot.lane.b32.xlu0 %v30, 2
    %v71 = vpop.permute.xlu0 %70
    %72 = vrot.lane.b32.xlu0 %v31, 2
    %v73 = vpop.permute.xlu0 %72
    %74 = vrot.lane.b32.xlu0 %v32, 2
    %v75 = vpop.permute.xlu0 %74
    %76 = vrot.lane.b32.xlu0 %v33, 2
    %v77 = vpop.permute.xlu0 %76
    %78 = vrot.lane.b32.xlu0 %v34, 2
    %v79 = vpop.permute.xlu0 %78
    %80 = vrot.lane.b32.xlu0 %v35, 2
    %v81 = vpop.permute.xlu0 %80
    %82 = vrot.lane.b32.xlu0 %v36, 2
    %v83 = vpop.permute.xlu0 %82
    %84 = vrot.lane.b32.xlu0 %v37, 2
    %v85 = vpop.permute.xlu0 %84
    %vm102 = vcmask 146448
    %103 = vst.msk [vmem:[%s1 + $0x1] sm:$0xff] %vm102, %v55
    %104 = vst.msk [vmem:[%s1 + $0x9] sm:$0xff] %vm102, %v57
    %105 = vst.msk [vmem:[%s1 + $0x19] sm:$0xff] %vm102, %v59
    %106 = vst.msk [vmem:[%s1 + $0x21] sm:$0xff] %vm102, %v61
    %107 = vst.msk [vmem:[%s1 + $0x31] sm:$0xff] %vm102, %v63
    %108 = vst.msk [vmem:[%s1 + $0x39] sm:$0xff] %vm102, %v65
    %109 = vst.msk [vmem:[%s1 + $0x49] sm:$0xff] %vm102, %v67
    %110 = vst.msk [vmem:[%s1 + $0x51] sm:$0xff] %vm102, %v69
    %111 = vst.msk [vmem:[%s1 + $0x61] sm:$0xff] %vm102, %v71
    %112 = vst.msk [vmem:[%s1 + $0x69] sm:$0xff] %vm102, %v73
    %113 = vst.msk [vmem:[%s1 + $0x79] sm:$0xff] %vm102, %v75
    %114 = vst.msk [vmem:[%s1 + $0x81] sm:$0xff] %vm102, %v77
    %115 = vst.msk [vmem:[%s1 + $0x91] sm:$0xff] %vm102, %v79
    %116 = vst.msk [vmem:[%s1 + $0x99] sm:$0xff] %vm102, %v81
    %117 = vst.msk [vmem:[%s1 + $0xa9] sm:$0xff] %vm102, %v83
    %118 = vst.msk [vmem:[%s1 + $0xb1] sm:$0xff] %vm102, %v85
    %v119 = vld [vmem:[#allocation2] sm:$0xff]
    %v120 = vld [vmem:[#allocation2 + $0x8] sm:$0xff]
    %v121 = vld [vmem:[#allocation2 + $0x10] sm:$0xff]
    %v122 = vld [vmem:[#allocation2 + $0x18] sm:$0xff]
    %v123 = vld [vmem:[#allocation2 + $0x20] sm:$0xff]
    %v124 = vld [vmem:[#allocation2 + $0x28] sm:$0xff]
    %v125 = vld [vmem:[#allocation2 + $0x30] sm:$0xff]
    %v126 = vld [vmem:[#allocation2 + $0x38] sm:$0xff]
    %v127 = vld [vmem:[#allocation2 + $0x40] sm:$0xff]
    %v128 = vld [vmem:[#allocation2 + $0x48] sm:$0xff]
    %v129 = vld [vmem:[#allocation2 + $0x50] sm:$0xff]
    %v130 = vld [vmem:[#allocation2 + $0x58] sm:$0xff]
    %v131 = vld [vmem:[#allocation2 + $0x60] sm:$0xff]
    %v132 = vld [vmem:[#allocation2 + $0x68] sm:$0xff]
    %v133 = vld [vmem:[#allocation2 + $0x70] sm:$0xff]
    %v134 = vld [vmem:[#allocation2 + $0x78] sm:$0xff]
    %151 = vrot.lane.b32.xlu0 %v119, 114
    %v152 = vpop.permute.xlu0 %151
    %153 = vrot.lane.b32.xlu0 %v120, 114
    %v154 = vpop.permute.xlu0 %153
    %155 = vrot.lane.b32.xlu0 %v121, 114
    %v156 = vpop.permute.xlu0 %155
    %157 = vrot.lane.b32.xlu0 %v122, 114
    %v158 = vpop.permute.xlu0 %157
    %159 = vrot.lane.b32.xlu0 %v123, 114
    %v160 = vpop.permute.xlu0 %159
    %161 = vrot.lane.b32.xlu0 %v124, 114
    %v162 = vpop.permute.xlu0 %161
    %163 = vrot.lane.b32.xlu0 %v125, 114
    %v164 = vpop.permute.xlu0 %163
    %165 = vrot.lane.b32.xlu0 %v126, 114
    %v166 = vpop.permute.xlu0 %165
    %167 = vrot.lane.b32.xlu0 %v127, 114
    %v168 = vpop.permute.xlu0 %167
    %169 = vrot.lane.b32.xlu0 %v128, 114
    %v170 = vpop.permute.xlu0 %169
    %171 = vrot.lane.b32.xlu0 %v129, 114
    %v172 = vpop.permute.xlu0 %171
    %173 = vrot.lane.b32.xlu0 %v130, 114
    %v174 = vpop.permute.xlu0 %173
    %175 = vrot.lane.b32.xlu0 %v131, 114
    %v176 = vpop.permute.xlu0 %175
    %177 = vrot.lane.b32.xlu0 %v132, 114
    %v178 = vpop.permute.xlu0 %177
    %179 = vrot.lane.b32.xlu0 %v133, 114
    %v180 = vpop.permute.xlu0 %179
    %181 = vrot.lane.b32.xlu0 %v134, 114
    %v182 = vpop.permute.xlu0 %181
    %vm199 = vcmask 15360
    %200 = vst.msk [vmem:[%s1 + $0x1] sm:$0xff] %vm199, %v152
    %201 = vst.msk [vmem:[%s1 + $0x9] sm:$0xff] %vm199, %v154
    %202 = vst.msk [vmem:[%s1 + $0x19] sm:$0xff] %vm199, %v156
    %203 = vst.msk [vmem:[%s1 + $0x21] sm:$0xff] %vm199, %v158
    %204 = vst.msk [vmem:[%s1 + $0x31] sm:$0xff] %vm199, %v160
    %205 = vst.msk [vmem:[%s1 + $0x39] sm:$0xff] %vm199, %v162
    %206 = vst.msk [vmem:[%s1 + $0x49] sm:$0xff] %vm199, %v164
    %207 = vst.msk [vmem:[%s1 + $0x51] sm:$0xff] %vm199, %v166
    %208 = vst.msk [vmem:[%s1 + $0x61] sm:$0xff] %vm199, %v168
    %209 = vst.msk [vmem:[%s1 + $0x69] sm:$0xff] %vm199, %v170
    %210 = vst.msk [vmem:[%s1 + $0x79] sm:$0xff] %vm199, %v172
    %211 = vst.msk [vmem:[%s1 + $0x81] sm:$0xff] %vm199, %v174
    %212 = vst.msk [vmem:[%s1 + $0x91] sm:$0xff] %vm199, %v176
    %213 = vst.msk [vmem:[%s1 + $0x99] sm:$0xff] %vm199, %v178
    %214 = vst.msk [vmem:[%s1 + $0xa9] sm:$0xff] %vm199, %v180
    %215 = vst.msk [vmem:[%s1 + $0xb1] sm:$0xff] %vm199, %v182
    %v216 = vld [vmem:[#allocation2] sm:$0xff]
    %v217 = vld [vmem:[#allocation2 + $0x8] sm:$0xff]
    %v218 = vld [vmem:[#allocation2 + $0x10] sm:$0xff]
    %v219 = vld [vmem:[#allocation2 + $0x18] sm:$0xff]
    %v220 = vld [vmem:[#allocation2 + $0x20] sm:$0xff]
    %v221 = vld [vmem:[#allocation2 + $0x28] sm:$0xff]
    %v222 = vld [vmem:[#allocation2 + $0x30] sm:$0xff]
    %v223 = vld [vmem:[#allocation2 + $0x38] sm:$0xff]
    %v224 = vld [vmem:[#allocation2 + $0x40] sm:$0xff]
    %v225 = vld [vmem:[#allocation2 + $0x48] sm:$0xff]
    %v226 = vld [vmem:[#allocation2 + $0x50] sm:$0xff]
    %v227 = vld [vmem:[#allocation2 + $0x58] sm:$0xff]
    %v228 = vld [vmem:[#allocation2 + $0x60] sm:$0xff]
    %v229 = vld [vmem:[#allocation2 + $0x68] sm:$0xff]
    %v230 = vld [vmem:[#allocation2 + $0x70] sm:$0xff]
    %v231 = vld [vmem:[#allocation2 + $0x78] sm:$0xff]
    %248 = vrot.lane.b32.xlu0 %v216, 18
    %v249 = vpop.permute.xlu0 %248
    %250 = vrot.lane.b32.xlu0 %v217, 18
    %v251 = vpop.permute.xlu0 %250
    %252 = vrot.lane.b32.xlu0 %v218, 18
    %v253 = vpop.permute.xlu0 %252
    %254 = vrot.lane.b32.xlu0 %v219, 18
    %v255 = vpop.permute.xlu0 %254
    %256 = vrot.lane.b32.xlu0 %v220, 18
    %v257 = vpop.permute.xlu0 %256
    %258 = vrot.lane.b32.xlu0 %v221, 18
    %v259 = vpop.permute.xlu0 %258
    %260 = vrot.lane.b32.xlu0 %v222, 18
    %v261 = vpop.permute.xlu0 %260
    %262 = vrot.lane.b32.xlu0 %v223, 18
    %v263 = vpop.permute.xlu0 %262
    %264 = vrot.lane.b32.xlu0 %v224, 18
    %v265 = vpop.permute.xlu0 %264
    %266 = vrot.lane.b32.xlu0 %v225, 18
    %v267 = vpop.permute.xlu0 %266
    %268 = vrot.lane.b32.xlu0 %v226, 18
    %v269 = vpop.permute.xlu0 %268
    %270 = vrot.lane.b32.xlu0 %v227, 18
    %v271 = vpop.permute.xlu0 %270
    %272 = vrot.lane.b32.xlu0 %v228, 18
    %v273 = vpop.permute.xlu0 %272
    %274 = vrot.lane.b32.xlu0 %v229, 18
    %v275 = vpop.permute.xlu0 %274
    %276 = vrot.lane.b32.xlu0 %v230, 18
    %v277 = vpop.permute.xlu0 %276
    %278 = vrot.lane.b32.xlu0 %v231, 18
    %v279 = vpop.permute.xlu0 %278
    %vm296 = vcmask 162960
    %297 = vst.msk [vmem:[%s1 + $0x1] sm:$0xff] %vm296, %v249
    %298 = vst.msk [vmem:[%s1 + $0x9] sm:$0xff] %vm296, %v251
    %299 = vst.msk [vmem:[%s1 + $0x19] sm:$0xff] %vm296, %v253
    %300 = vst.msk [vmem:[%s1 + $0x21] sm:$0xff] %vm296, %v255
    %301 = vst.msk [vmem:[%s1 + $0x31] sm:$0xff] %vm296, %v257
    %302 = vst.msk [vmem:[%s1 + $0x39] sm:$0xff] %vm296, %v259
    %303 = vst.msk [vmem:[%s1 + $0x49] sm:$0xff] %vm296, %v261
    %304 = vst.msk [vmem:[%s1 + $0x51] sm:$0xff] %vm296, %v263
    %305 = vst.msk [vmem:[%s1 + $0x61] sm:$0xff] %vm296, %v265
    %306 = vst.msk [vmem:[%s1 + $0x69] sm:$0xff] %vm296, %v267
    %307 = vst.msk [vmem:[%s1 + $0x79] sm:$0xff] %vm296, %v269
    %308 = vst.msk [vmem:[%s1 + $0x81] sm:$0xff] %vm296, %v271
    %309 = vst.msk [vmem:[%s1 + $0x91] sm:$0xff] %vm296, %v273
    %310 = vst.msk [vmem:[%s1 + $0x99] sm:$0xff] %vm296, %v275
    %311 = vst.msk [vmem:[%s1 + $0xa9] sm:$0xff] %vm296, %v277
    %312 = vst.msk [vmem:[%s1 + $0xb1] sm:$0xff] %vm296, %v279
    %vm313 = vcmask 155648
    %314 = vst.msk [vmem:[%s1] sm:$0x1] %vm313, 0.0
    %315 = vst.msk [vmem:[%s1 + $0x18] sm:$0x1] %vm313, 0.0
    %316 = vst.msk [vmem:[%s1 + $0x30] sm:$0x1] %vm313, 0.0
    %317 = vst.msk [vmem:[%s1 + $0x48] sm:$0x1] %vm313, 0.0
    %318 = vst.msk [vmem:[%s1 + $0x60] sm:$0x1] %vm313, 0.0
    %319 = vst.msk [vmem:[%s1 + $0x78] sm:$0x1] %vm313, 0.0
    %320 = vst.msk [vmem:[%s1 + $0x90] sm:$0x1] %vm313, 0.0
    %321 = vst.msk [vmem:[%s1 + $0xa8] sm:$0x1] %vm313, 0.0
    %322 = vst.msk [vmem:[%s1 + $0x11] sm:$0x1] %vm313, 0.0
    %323 = vst.msk [vmem:[%s1 + $0x29] sm:$0x1] %vm313, 0.0
    %324 = vst.msk [vmem:[%s1 + $0x41] sm:$0x1] %vm313, 0.0
    %325 = vst.msk [vmem:[%s1 + $0x59] sm:$0x1] %vm313, 0.0
    %326 = vst.msk [vmem:[%s1 + $0x71] sm:$0x1] %vm313, 0.0
    %327 = vst.msk [vmem:[%s1 + $0x89] sm:$0x1] %vm313, 0.0
    %328 = vst.msk [vmem:[%s1 + $0xa1] sm:$0x1] %vm313, 0.0
    %329 = vst.msk [vmem:[%s1 + $0xb9] sm:$0x1] %vm313, 0.0
    // Predicated region
    $region10: #{tpu_custom_call.1} parent=1 // pred_check
      _
    $region11: #{tpu_custom_call.1} parent=1 // pred_check_branch
      %331 = sbr.rel (0) target = $region13
    $region12: #{tpu_custom_call.1} parent=1 // pred_region
      _
    $region13: #{tpu_custom_call.1} parent=1 // pred_fallthru
      _
    // Predicated region
    $region14: #{tpu_custom_call.1} parent=1 // pred_check
      _
    $region15: #{tpu_custom_call.1} parent=1 // pred_check_branch
      %333 = sbr.rel (0) target = $region17
    $region16: #{tpu_custom_call.1} parent=1 // pred_region
      _
    $region17: #{tpu_custom_call.1} parent=1 // pred_fallthru
      _
    %334 = vsyncpa [#allocation3], 1

</llo_original>
